<compile_context>
chip_gen: v6e
topology: v6e:2x2x1
jax: 0.10.0
libtpu: 0.0.40
codegen_flags: <defaults>
</compile_context>

<pallas_src>
import jax
import jax.numpy as jnp
from jax.experimental import pallas as pl
from jax.experimental.pallas import tpu as pltpu


def _round_up(x, m):
    return (x + m - 1) // m * m


def _pick_tile(n, target, align=128):
    """Largest multiple of `align` that is <= target and divides n."""
    t = min(target, n)
    t = max(align, (t // align) * align)
    while n % t:
        t -= align
    return t


def _sage_kernel_agg_then_project(adj_ref, x_ref, hself_ref, dinv_ref,
                                  wself_ref, wneigh_ref, b_ref, out_ref, acc_ref):
    """Aggregate-then-project: out = H_self @ Ws + dinv * (A @ X) @ Wn + b.

    adj_ref   : (tm, tk)       int8 {0,1} adjacency tile
    x_ref     : (tk, din_p)    bf16 neighbor features for this K tile
    hself_ref : (tm, din_p)    bf16 self features for this node block
    dinv_ref  : (tm, 1)        f32 per-row 1/deg
    wself_ref : (din_p, dout_p) bf16 (zero-padded)
    wneigh_ref: (din_p, dout_p) bf16 (zero-padded)
    b_ref     : (1, dout_p)    f32
    out_ref   : (tm, dout_p)   f32
    acc_ref   : (tm, din_p)    f32 VMEM accumulator (raw neighbor sum)
    """
    k = pl.program_id(1)

    @pl.when(k == 0)
    def _():
        acc_ref[...] = jnp.zeros_like(acc_ref)

    a = adj_ref[...].astype(jnp.bfloat16)
    acc_ref[...] += jnp.dot(a, x_ref[...], preferred_element_type=jnp.float32)

    @pl.when(k == pl.num_programs(1) - 1)
    def _():
        neigh = (acc_ref[...] * dinv_ref[...]).astype(jnp.bfloat16)
        out = (
            jnp.dot(hself_ref[...], wself_ref[...], preferred_element_type=jnp.float32)
            + jnp.dot(neigh, wneigh_ref[...], preferred_element_type=jnp.float32)
            + b_ref[...]
        )
        out_ref[...] = out.astype(out_ref.dtype)


def _sage_kernel_preprojected(adj_ref, x_ref, hself_ref, dinv_ref,
                              wself_ref, b_ref, out_ref):
    """Project-then-aggregate: X = (H @ Wn) precomputed; out = H_self @ Ws + dinv*(A@X) + b.

    The raw neighbor sum is accumulated directly in the resident f32 out_ref block
    (its block index depends only on i), so no VMEM scratch is needed.
    """
    k = pl.program_id(1)

    @pl.when(k == 0)
    def _():
        out_ref[...] = jnp.zeros_like(out_ref)

    a = adj_ref[...].astype(jnp.bfloat16)
    out_ref[...] += jnp.dot(a, x_ref[...], preferred_element_type=jnp.float32)

    @pl.when(k == pl.num_programs(1) - 1)
    def _():
        out_ref[...] = (
            out_ref[...] * dinv_ref[...]
            + jnp.dot(hself_ref[...], wself_ref[...], preferred_element_type=jnp.float32)
            + b_ref[...]
        )


def sage_conv(adj_i8, deg_inv, h, w_self, w_neigh, bias, *,
              tm_target=1024, tk_target=1024):
    """DGL-style SAGEConv('mean'): (1/deg)*(A @ h) @ W_neigh + h @ W_self + b."""
    N, din = h.shape
    din_w, dout = w_self.shape
    assert din_w == din and w_neigh.shape == (din, dout)
    assert adj_i8.shape == (N, N) and deg_inv.shape == (N, 1)
    assert N % 128 == 0, "pad the node count to a multiple of 128"

    din_p = _round_up(din, 128)            # lane-dense streamed feature width
    dout_p = _round_up(dout, 128)          # lane-dense output / weight width

    tm = _pick_tile(N, tm_target)          # destination-node block (parallel axis)
    tk = _pick_tile(N, tk_target)          # neighbor block (reduction axis)
    # v7x has 2 TensorCores: keep >= 2 row blocks so the "parallel" axis can shard.
    if N // tm < 2 and N >= 256:
        tm = _pick_tile(N, N // 2)

    # bf16 operands (f32 accumulation on the MXU), zero-padded to lane-dense widths.
    h_bf = jnp.zeros((N, din_p), jnp.bfloat16).at[:, :din].set(h.astype(jnp.bfloat16))
    wself_p = jnp.zeros((din_p, dout_p), jnp.bfloat16).at[:din, :dout].set(
        w_self.astype(jnp.bfloat16))
    bias_p = jnp.zeros((1, dout_p), jnp.float32).at[:, :dout].set(
        bias.astype(jnp.float32))
    dinv = deg_inv.astype(jnp.float32)

    # Stream the narrower (padded) width through the N^2 matmul.
    pre_project = dout_p < din_p

    if pre_project:
        # Project once outside the kernel (N*din*dout), then aggregate width dout_p.
        xw = jnp.dot(h.astype(jnp.bfloat16), w_neigh.astype(jnp.bfloat16),
                     preferred_element_type=jnp.float32)
        x = jnp.zeros((N, dout_p), jnp.bfloat16).at[:, :dout].set(
            xw.astype(jnp.bfloat16))
        dx = dout_p
        kernel = _sage_kernel_preprojected
        inputs = (adj_i8, x, h_bf, dinv, wself_p, bias_p)
        in_specs = [
            pl.BlockSpec((tm, tk), lambda i, k: (i, k)),         # adjacency tile (int8)
            pl.BlockSpec((tk, dx), lambda i, k: (k, 0)),         # pre-projected feats
            pl.BlockSpec((tm, din_p), lambda i, k: (i, 0)),      # self features
            pl.BlockSpec((tm, 1), lambda i, k: (i, 0)),          # 1/deg per row
            pl.BlockSpec((din_p, dout_p), lambda i, k: (0, 0)),  # W_self
            pl.BlockSpec((1, dout_p), lambda i, k: (0, 0)),      # bias
        ]
        scratch_shapes = []
    else:
        x = h_bf
        dx = din_p
        kernel = _sage_kernel_agg_then_project
        wneigh_p = jnp.zeros((din_p, dout_p), jnp.bfloat16).at[:din, :dout].set(
            w_neigh.astype(jnp.bfloat16))
        inputs = (adj_i8, x, h_bf, dinv, wself_p, wneigh_p, bias_p)
        in_specs = [
            pl.BlockSpec((tm, tk), lambda i, k: (i, k)),         # adjacency tile (int8)
            pl.BlockSpec((tk, dx), lambda i, k: (k, 0)),         # neighbor features
            pl.BlockSpec((tm, din_p), lambda i, k: (i, 0)),      # self features
            pl.BlockSpec((tm, 1), lambda i, k: (i, 0)),          # 1/deg per row
            pl.BlockSpec((din_p, dout_p), lambda i, k: (0, 0)),  # W_self
            pl.BlockSpec((din_p, dout_p), lambda i, k: (0, 0)),  # W_neigh
            pl.BlockSpec((1, dout_p), lambda i, k: (0, 0)),      # bias
        ]
        scratch_shapes = [pltpu.VMEM((tm, dx), jnp.float32)]

    # VMEM budget from the actual per-step footprint (double-buffered streamed tiles
    # + resident weights/acc), with headroom; capped at 64 MiB for v7x portability.
    vmem_bytes = (
        2 * tm * tk * 1                                       # adjacency (int8)
        + 2 * tk * dx * 2                                     # x tiles (bf16)
        + 2 * tm * din_p * 2                                  # self features (bf16)
        + 2 * tm * 1 * 4                                      # 1/deg
        + 2 * din_p * dout_p * 2 * (1 if pre_project else 2)  # weights (bf16)
        + 2 * 1 * dout_p * 4                                  # bias
        + 2 * tm * dout_p * 4                                 # output (f32)
        + (0 if pre_project else tm * dx * 4)                 # acc scratch
    )
    vmem_limit = min(max(int(vmem_bytes * 1.5) + (4 << 20), 32 << 20), 64 << 20)

    out_padded = pl.pallas_call(
        kernel,
        out_shape=jax.ShapeDtypeStruct((N, dout_p), jnp.float32),
        grid_spec=pltpu.PrefetchScalarGridSpec(
            num_scalar_prefetch=0,
            grid=(N // tm, N // tk),
            in_specs=in_specs,
            out_specs=pl.BlockSpec((tm, dout_p), lambda i, k: (i, 0)),
            scratch_shapes=scratch_shapes,
        ),
        compiler_params=pltpu.CompilerParams(
            dimension_semantics=("parallel", "arbitrary"),
            vmem_limit_bytes=vmem_limit,
        ),
    )(*inputs)

    return out_padded[:, :dout]


def graphsage_forward(adj, features, params):
    """Two-layer GraphSAGE forward (no activation/dropout, matching the module)."""
    # TODO(synk): buffer.update(i, h) (distributed feature cache) treated as identity.
    adj_i8 = (adj != 0).astype(jnp.int8)          # binary adjacency, 1 byte/element
    deg = jnp.sum(adj_i8.astype(jnp.float32), axis=1, keepdims=True)
    deg_inv = (1.0 / jnp.maximum(deg, 1.0)).astype(jnp.float32)
    h = features
    for (w_self, w_neigh, bias) in params:
        h = sage_conv(adj_i8, deg_inv, h, w_self, w_neigh, bias)
    return h


def _reference(adj, features, params):
    adjf = (adj != 0).astype(jnp.float32)
    deg = jnp.maximum(adjf.sum(axis=1, keepdims=True), 1.0)
    a_norm = adjf / deg
    h = features
    for (w_self, w_neigh, bias) in params:
        h = h @ w_self + (a_norm @ h) @ w_neigh + bias
    return h


if __name__ == "__main__":
    # Small, deterministic synthetic problem.
    N = 128
    IN_SIZE = 32
    HID_SIZE = 64
    OUT_SIZE = 16

    key = jax.random.PRNGKey(0)
    k_adj, k_x, k1s, k1n, k2s, k2n, k3x, k3s, k3n = jax.random.split(key, 9)

    # Random sparse-ish directed graph, no self loops.
    adj = (jax.random.uniform(k_adj, (N, N)) < 0.1).astype(jnp.float32)
    adj = adj * (1.0 - jnp.eye(N, dtype=jnp.float32))

    features = jax.random.normal(k_x, (N, IN_SIZE), dtype=jnp.float32)

    def init_linear(k, fan_in, fan_out):
        # deterministic scaled-normal init; weight stored as [in, out]
        return (jax.random.normal(k, (fan_in, fan_out), dtype=jnp.float32)
                / jnp.sqrt(jnp.float32(fan_in)))

    params = [
        (init_linear(k1s, IN_SIZE, HID_SIZE),
         init_linear(k1n, IN_SIZE, HID_SIZE),
         jnp.zeros((HID_SIZE,), jnp.float32)),
        (init_linear(k2s, HID_SIZE, OUT_SIZE),
         init_linear(k2n, HID_SIZE, OUT_SIZE),
         jnp.zeros((OUT_SIZE,), jnp.float32)),
    ]

    out = jax.block_until_ready(graphsage_forward(adj, features, params))
    ref = _reference(adj, features, params)
    assert out.shape == (N, OUT_SIZE)
    # Self features / weights / pre-projection run in bf16 (f32 accumulation);
    # adjacency + 1/deg are exact (int8 + f32 scale).
    assert jnp.allclose(out, ref, atol=5e-2, rtol=5e-2), "mismatch vs JAX reference"

    # Also exercise the project-then-aggregate path (wide input, narrow output).
    DIN_W, DOUT_N = 256, 8
    h_wide = jax.random.normal(k3x, (N, DIN_W), dtype=jnp.float32)
    ws_w = init_linear(k3s, DIN_W, DOUT_N)
    wn_w = init_linear(k3n, DIN_W, DOUT_N)
    b_w = jnp.zeros((DOUT_N,), jnp.float32)

    adj_i8 = (adj != 0).astype(jnp.int8)
    deg_inv = (1.0 / jnp.maximum(adj_i8.astype(jnp.float32).sum(1, keepdims=True), 1.0))
    out2 = jax.block_until_ready(
        sage_conv(adj_i8, deg_inv.astype(jnp.float32), h_wide, ws_w, wn_w, b_w))
    ref2 = h_wide @ ws_w + ((adj * deg_inv) @ h_wide) @ wn_w + b_w
    assert out2.shape == (N, DOUT_N)
    assert jnp.allclose(out2, ref2, atol=5e-2, rtol=5e-2), "mismatch (pre-projected path)"

    print("KERNEL_OK")
</pallas_src>

<mosaic_0001>
module attributes {stable_mosaic.version = 11 : i64} {
  func.func @_sage_kernel_agg_then_project(%arg0: i32, %arg1: i32, %arg2: memref<128x128xi8, #tpu.memory_space<vmem>>, %arg3: memref<128x128xbf16, #tpu.memory_space<vmem>>, %arg4: memref<128x128xbf16, #tpu.memory_space<vmem>>, %arg5: memref<128x1xf32, #tpu.memory_space<vmem>>, %arg6: memref<128x128xbf16, #tpu.memory_space<vmem>>, %arg7: memref<128x128xbf16, #tpu.memory_space<vmem>>, %arg8: memref<1x128xf32, #tpu.memory_space<vmem>>, %arg9: memref<128x128xf32, #tpu.memory_space<vmem>>, %arg10: memref<128x128xf32, #tpu.memory_space<vmem>>) attributes {dimension_semantics = [#tpu.dimension_semantics<parallel>, #tpu.dimension_semantics<arbitrary>], iteration_bounds = array<i64: 1, 1>, scalar_prefetch = 0 : i64, scratch_operands = 1 : i64, tpu.core_type = #tpu.core_type<tc>, window_params = [{transform_indices = @transform_0, window_bounds = array<i64: 128, 128>}, {transform_indices = @transform_1, window_bounds = array<i64: 128, 128>}, {transform_indices = @transform_2, window_bounds = array<i64: 128, 128>}, {transform_indices = @transform_3, window_bounds = array<i64: 128, 1>}, {pipeline_mode = #tpu.pipeline_mode<synchronous>, transform_indices = @transform_4, window_bounds = array<i64: 128, 128>}, {pipeline_mode = #tpu.pipeline_mode<synchronous>, transform_indices = @transform_5, window_bounds = array<i64: 128, 128>}, {pipeline_mode = #tpu.pipeline_mode<synchronous>, transform_indices = @transform_6, window_bounds = array<i64: 1, 128>}, {transform_indices = @transform_7, window_bounds = array<i64: 128, 128>}]} {
    %c0_i32 = arith.constant 0 : i32
    %0 = arith.cmpi eq, %arg1, %c0_i32 : i32
    %1 = arith.extui %0 : i1 to i32
    %c0_i32_0 = arith.constant 0 : i32
    %2 = arith.cmpi ne, %1, %c0_i32_0 : i32
    scf.if %2 {
      %cst_10 = arith.constant 0.000000e+00 : f32
      %13 = vector.broadcast %cst_10 : f32 to vector<128x128xf32>
      %c0_11 = arith.constant 0 : index
      %c0_12 = arith.constant 0 : index
      %14 = vector.load %arg10[%c0_11, %c0_12] : memref<128x128xf32, #tpu.memory_space<vmem>>, vector<128x128xf32>
      tpu.vector_store %arg10[%c0_11, %c0_12], %13 {strides = array<i32>} : memref<128x128xf32, #tpu.memory_space<vmem>>, vector<128x128xf32>,
    } else {
    }
    %c0 = arith.constant 0 : index
    %c0_1 = arith.constant 0 : index
    %3 = vector.load %arg2[%c0, %c0_1] : memref<128x128xi8, #tpu.memory_space<vmem>>, vector<128x128xi8>
    %4 = arith.sitofp %3 : vector<128x128xi8> to vector<128x128xbf16>
    %c0_2 = arith.constant 0 : index
    %c0_3 = arith.constant 0 : index
    %5 = vector.load %arg10[%c0_2, %c0_3] : memref<128x128xf32, #tpu.memory_space<vmem>>, vector<128x128xf32>
    %c0_4 = arith.constant 0 : index
    %c0_5 = arith.constant 0 : index
    %6 = vector.load %arg3[%c0_4, %c0_5] : memref<128x128xbf16, #tpu.memory_space<vmem>>, vector<128x128xbf16>
    %cst = arith.constant dense<0.000000e+00> : vector<128x128xf32>
    %7 = tpu.matmul %4, %6, %cst {dimension_numbers = #tpu.dot_dimension_numbers<[1], [0], [0], [1], [0, 0, 1, 1], [], []>} : vector<128x128xbf16>, vector<128x128xbf16>, vector<128x128xf32> -> vector<128x128xf32>
    %8 = arith.addf %5, %7 : vector<128x128xf32>
    %c0_6 = arith.constant 0 : index
    %c0_7 = arith.constant 0 : index
    %9 = vector.load %arg10[%c0_6, %c0_7] : memref<128x128xf32, #tpu.memory_space<vmem>>, vector<128x128xf32>
    tpu.vector_store %arg10[%c0_6, %c0_7], %8 {strides = array<i32>} : memref<128x128xf32, #tpu.memory_space<vmem>>, vector<128x128xf32>,
    %c0_i32_8 = arith.constant 0 : i32
    %10 = arith.cmpi eq, %arg1, %c0_i32_8 : i32
    %11 = arith.extui %10 : i1 to i32
    %c0_i32_9 = arith.constant 0 : i32
    %12 = arith.cmpi ne, %11, %c0_i32_9 : i32
    scf.if %12 {
      %c0_10 = arith.constant 0 : index
      %c0_11 = arith.constant 0 : index
      %13 = vector.load %arg10[%c0_10, %c0_11] : memref<128x128xf32, #tpu.memory_space<vmem>>, vector<128x128xf32>
      %c0_12 = arith.constant 0 : index
      %c0_13 = arith.constant 0 : index
      %14 = vector.load %arg5[%c0_12, %c0_13] : memref<128x1xf32, #tpu.memory_space<vmem>>, vector<128x1xf32>
      %15 = vector.broadcast %14 : vector<128x1xf32> to vector<128x128xf32>
      %16 = arith.mulf %13, %15 : vector<128x128xf32>
      %17 = arith.truncf %16 : vector<128x128xf32> to vector<128x128xbf16>
      %c0_14 = arith.constant 0 : index
      %c0_15 = arith.constant 0 : index
      %18 = vector.load %arg4[%c0_14, %c0_15] : memref<128x128xbf16, #tpu.memory_space<vmem>>, vector<128x128xbf16>
      %c0_16 = arith.constant 0 : index
      %c0_17 = arith.constant 0 : index
      %19 = vector.load %arg6[%c0_16, %c0_17] : memref<128x128xbf16, #tpu.memory_space<vmem>>, vector<128x128xbf16>
      %cst_18 = arith.constant dense<0.000000e+00> : vector<128x128xf32>
      %20 = tpu.matmul %18, %19, %cst_18 {dimension_numbers = #tpu.dot_dimension_numbers<[1], [0], [0], [1], [0, 0, 1, 1], [], []>} : vector<128x128xbf16>, vector<128x128xbf16>, vector<128x128xf32> -> vector<128x128xf32>
      %c0_19 = arith.constant 0 : index
      %c0_20 = arith.constant 0 : index
      %21 = vector.load %arg7[%c0_19, %c0_20] : memref<128x128xbf16, #tpu.memory_space<vmem>>, vector<128x128xbf16>
      %cst_21 = arith.constant dense<0.000000e+00> : vector<128x128xf32>
      %22 = tpu.matmul %17, %21, %cst_21 {dimension_numbers = #tpu.dot_dimension_numbers<[1], [0], [0], [1], [0, 0, 1, 1], [], []>} : vector<128x128xbf16>, vector<128x128xbf16>, vector<128x128xf32> -> vector<128x128xf32>
      %23 = arith.addf %20, %22 : vector<128x128xf32>
      %c0_22 = arith.constant 0 : index
      %c0_23 = arith.constant 0 : index
      %24 = vector.load %arg8[%c0_22, %c0_23] : memref<1x128xf32, #tpu.memory_space<vmem>>, vector<1x128xf32>
      %25 = vector.broadcast %24 : vector<1x128xf32> to vector<128x128xf32>
      %26 = arith.addf %23, %25 : vector<128x128xf32>
      %c0_24 = arith.constant 0 : index
      %c0_25 = arith.constant 0 : index
      %27 = vector.load %arg9[%c0_24, %c0_25] : memref<128x128xf32, #tpu.memory_space<vmem>>, vector<128x128xf32>
      tpu.vector_store %arg9[%c0_24, %c0_25], %26 {strides = array<i32>} : memref<128x128xf32, #tpu.memory_space<vmem>>, vector<128x128xf32>,
    } else {
    }
    return
  }
  func.func @transform_0(%arg0: i32, %arg1: i32) -> (i32, i32) {
    %c0_i32 = arith.constant 0 : i32
    return %arg0, %arg1 : i32, i32
  }
  func.func @transform_1(%arg0: i32, %arg1: i32) -> (i32, i32) {
    %c0_i32 = arith.constant 0 : i32
    %c0_i32_0 = arith.constant 0 : i32
    return %arg1, %c0_i32 : i32, i32
  }
  func.func @transform_2(%arg0: i32, %arg1: i32) -> (i32, i32) {
    %c0_i32 = arith.constant 0 : i32
    %c0_i32_0 = arith.constant 0 : i32
    return %arg0, %c0_i32 : i32, i32
  }
  func.func @transform_3(%arg0: i32, %arg1: i32) -> (i32, i32) {
    %c0_i32 = arith.constant 0 : i32
    %c0_i32_0 = arith.constant 0 : i32
    return %arg0, %c0_i32 : i32, i32
  }
  func.func @transform_4(%arg0: i32, %arg1: i32) -> (i32, i32) {
    %c0_i32 = arith.constant 0 : i32
    %c0_i32_0 = arith.constant 0 : i32
    %c0_i32_1 = arith.constant 0 : i32
    return %c0_i32, %c0_i32_0 : i32, i32
  }
  func.func @transform_5(%arg0: i32, %arg1: i32) -> (i32, i32) {
    %c0_i32 = arith.constant 0 : i32
    %c0_i32_0 = arith.constant 0 : i32
    %c0_i32_1 = arith.constant 0 : i32
    return %c0_i32, %c0_i32_0 : i32, i32
  }
  func.func @transform_6(%arg0: i32, %arg1: i32) -> (i32, i32) {
    %c0_i32 = arith.constant 0 : i32
    %c0_i32_0 = arith.constant 0 : i32
    %c0_i32_1 = arith.constant 0 : i32
    return %c0_i32, %c0_i32_0 : i32, i32
  }
  func.func @transform_7(%arg0: i32, %arg1: i32) -> (i32, i32) {
    %c0_i32 = arith.constant 0 : i32
    %c0_i32_0 = arith.constant 0 : i32
    return %arg0, %c0_i32 : i32, i32
  }
}

</mosaic_0001>

<llo_original>
// kernel: tpu_custom_call.1
$region0: #{tpu_custom_call.1}
  #allocation0 [shape = 'u32[]', space=smem, size = 0x4, offset = 0x4, fixed_abs, tag = 'smem constant byte address 0x4 - core index']
  #allocation1 [shape = 'u32[144,128]{1,0:T(1,128)}', space=vmem, size = 0x12000, scoped, tag = 'internal scratch']
  #allocation2 [shape = 'f32[128,128]{1,0:T(8,128)}', space=vmem, size = 0x10000, scoped, tag = 'scratch operand']
  %s0 = inlined_call_operand.hbm [shape: s8[128,128], index: 0, kind: input, shape index: {}]
  %s1 = inlined_call_operand.vmem [shape: bf16[128,128], index: 1, kind: input, shape index: {}]
  %s2 = inlined_call_operand.vmem [shape: bf16[128,128], index: 2, kind: input, shape index: {}]
  %s3 = inlined_call_operand.vmem [shape: f32[128,1], index: 3, kind: input, shape index: {}]
  %s4 = inlined_call_operand.hbm [shape: bf16[128,128], index: 4, kind: input, shape index: {}]
  %s5 = inlined_call_operand.hbm [shape: bf16[128,128], index: 5, kind: input, shape index: {}]
  %s6 = inlined_call_operand.vmem [shape: f32[1,128], index: 6, kind: input, shape index: {}]
  %s7 = inlined_call_operand.hbm [shape: f32[128,128], index: 7, kind: output, shape index: {}]
  %s8 = sld [smem:[#allocation0]]
  $region58: #{tpu_custom_call.1} parent=0
    _
  %s10 = ssub.s32 1, %s8
  %s11 = scalar_select 0, %s10, %s8
  $region1: #{tpu_custom_call.1} parent=0
    #allocation3 [shape = 'u8[16384]{0}', space=vmem, size = 0x4000, scoped, tag = 'input window, operand 0, single buffered']
    #allocation4 [shape = 's32[1]{0}', space=sflag, size = 0x4, scoped, tag = 'scoped memory for tpu_custom_call.1']
    #allocation5 [shape = 's32[1]{0}', space=sflag, size = 0x4, scoped, tag = 'scoped memory for tpu_custom_call.1']
    #allocation6 [shape = 'u8[32768]{0}', space=vmem, size = 0x8000, scoped, tag = 'input window, operand 4, single buffered']
    #allocation7 [shape = 's32[1]{0}', space=sflag, size = 0x4, scoped, tag = 'scoped memory for tpu_custom_call.1']
    #allocation8 [shape = 'u8[32768]{0}', space=vmem, size = 0x8000, scoped, tag = 'input window, operand 5, single buffered']
    #allocation9 [shape = 'u8[65536]{0}', space=vmem, size = 0x10000, scoped, tag = 'output window, operand 0, single buffered']
    %12 = vsyncpa [#allocation4], 0
    %13 = vsyncpa [#allocation7], 0
    %14 = vsyncpa [#allocation5], 0
    // Predicated region
    $region2: #{tpu_custom_call.1} parent=1 // pred_check
      _
    $region3: #{tpu_custom_call.1} parent=1 // pred_check_branch
      %16 = sbr.rel (0) target = $region5
    $region4: #{tpu_custom_call.1} parent=1 // pred_region
      %s18 = ssub.s32 512, 512
      %19 = vsyncadd [#allocation4], %s18
      %s20 = sshll.u32 [#allocation3], 4
      %s21 = int_to_ptr.vmem [resolvable:$true] %s20
      %26 = dma.hbm_to_vmem [thread:$0]  %s0, 512, %s21, [#allocation4], 128, 128, 8
    $region5: #{tpu_custom_call.1} parent=1 // pred_fallthru
      _
    // Predicated region
    $region6: #{tpu_custom_call.1} parent=1 // pred_check
      _
    $region7: #{tpu_custom_call.1} parent=1 // pred_check_branch
      %28 = sbr.rel (0) target = $region9
    $region8: #{tpu_custom_call.1} parent=1 // pred_region
      _
    $region9: #{tpu_custom_call.1} parent=1 // pred_fallthru
      _
    // Predicated region
    $region10: #{tpu_custom_call.1} parent=1 // pred_check
      _
    $region11: #{tpu_custom_call.1} parent=1 // pred_check_branch
      %30 = sbr.rel (0) target = $region13
    $region12: #{tpu_custom_call.1} parent=1 // pred_region
      _
    $region13: #{tpu_custom_call.1} parent=1 // pred_fallthru
      _
    // Predicated region
    $region14: #{tpu_custom_call.1} parent=1 // pred_check
      _
    $region15: #{tpu_custom_call.1} parent=1 // pred_check_branch
      %32 = sbr.rel (0) target = $region17
    $region16: #{tpu_custom_call.1} parent=1 // pred_region
      _
    $region17: #{tpu_custom_call.1} parent=1 // pred_fallthru
      _
    // Predicated region
    $region18: #{tpu_custom_call.1} parent=1 // pred_check
      _
    $region19: #{tpu_custom_call.1} parent=1 // pred_check_branch
      %34 = sbr.rel (0) target = $region21
    $region20: #{tpu_custom_call.1} parent=1 // pred_region
      %s36 = ssub.s32 1024, 1024
      %37 = vsyncadd [#allocation7], %s36
      %s38 = sshll.u32 [#allocation6], 4
      %s39 = int_to_ptr.vmem [resolvable:$true] %s38
      %44 = dma.hbm_to_vmem [thread:$0]  %s4, 1024, %s39, [#allocation7], 64, 64, 4
    $region21: #{tpu_custom_call.1} parent=1 // pred_fallthru
      _
    // Predicated region
    $region22: #{tpu_custom_call.1} parent=1 // pred_check
      _
    $region23: #{tpu_custom_call.1} parent=1 // pred_check_branch
      %46 = sbr.rel (0) target = $region25
    $region24: #{tpu_custom_call.1} parent=1 // pred_region
      %s48 = ssub.s32 1024, 1024
      %49 = vsyncadd [#allocation7], %s48
      %s50 = sshll.u32 [#allocation8], 4
      %s51 = int_to_ptr.vmem [resolvable:$true] %s50
      %56 = dma.hbm_to_vmem [thread:$0]  %s5, 1024, %s51, [#allocation7], 64, 64, 4
    $region25: #{tpu_custom_call.1} parent=1 // pred_fallthru
      _
    // Predicated region
    $region26: #{tpu_custom_call.1} parent=1 // pred_check
      _
    $region27: #{tpu_custom_call.1} parent=1 // pred_check_branch
      %58 = sbr.rel (0) target = $region29
    $region28: #{tpu_custom_call.1} parent=1 // pred_region
      _
    $region29: #{tpu_custom_call.1} parent=1 // pred_fallthru
      _
    // Predicated region
    $region30: #{tpu_custom_call.1} parent=1 // pred_check
      _
    $region31: #{tpu_custom_call.1} parent=1 // pred_check_branch
      %60 = sbr.rel (0) target = $region33
    $region32: #{tpu_custom_call.1} parent=1 // pred_region
      %61 = dma.done [#allocation4], 512
    $region33: #{tpu_custom_call.1} parent=1 // pred_fallthru
      _
    // Predicated region
    $region34: #{tpu_custom_call.1} parent=1 // pred_check
      _
    $region35: #{tpu_custom_call.1} parent=1 // pred_check_branch
      %63 = sbr.rel (0) target = $region37
    $region36: #{tpu_custom_call.1} parent=1 // pred_region
      %64 = dma.done [#allocation7], 1024
    $region37: #{tpu_custom_call.1} parent=1 // pred_fallthru
      _
    // Predicated region
    $region38: #{tpu_custom_call.1} parent=1 // pred_check
      _
    $region39: #{tpu_custom_call.1} parent=1 // pred_check_branch
      %66 = sbr.rel (0) target = $region41
    $region40: #{tpu_custom_call.1} parent=1 // pred_region
      %67 = dma.done [#allocation7], 1024
    $region41: #{tpu_custom_call.1} parent=1 // pred_fallthru
      _
    %p69 = scmp.eq.s32.totalorder 0, 0
    // Predicated region
    $region42: #{tpu_custom_call.1} parent=1 // pred_check
      %p70 = pneg %p69
    $region43: #{tpu_custom_call.1} parent=1 // pred_check_branch
      %72 = sbr.rel (%p70) target = $region45
    $region44: #{tpu_custom_call.1} parent=1 // pred_region
      %73 = vst [vmem:[#allocation2] sm:$0xff] 0.0
      %74 = vst [vmem:[#allocation2 + $0x8] sm:$0xff] 0.0
      %75 = vst [vmem:[#allocation2 + $0x10] sm:$0xff] 0.0
      %76 = vst [vmem:[#allocation2 + $0x18] sm:$0xff] 0.0
      %77 = vst [vmem:[#allocation2 + $0x20] sm:$0xff] 0.0
      %78 = vst [vmem:[#allocation2 + $0x28] sm:$0xff] 0.0
      %79 = vst [vmem:[#allocation2 + $0x30] sm:$0xff] 0.0
      %80 = vst [vmem:[#allocation2 + $0x38] sm:$0xff] 0.0
      %81 = vst [vmem:[#allocation2 + $0x40] sm:$0xff] 0.0
      %82 = vst [vmem:[#allocation2 + $0x48] sm:$0xff] 0.0
      %83 = vst [vmem:[#allocation2 + $0x50] sm:$0xff] 0.0
      %84 = vst [vmem:[#allocation2 + $0x58] sm:$0xff] 0.0
      %85 = vst [vmem:[#allocation2 + $0x60] sm:$0xff] 0.0
      %86 = vst [vmem:[#allocation2 + $0x68] sm:$0xff] 0.0
      %87 = vst [vmem:[#allocation2 + $0x70] sm:$0xff] 0.0
      %88 = vst [vmem:[#allocation2 + $0x78] sm:$0xff] 0.0
    $region45: #{tpu_custom_call.1} parent=1 // pred_fallthru
      _
    %v89 = vld [vmem:[#allocation3] sm:$0xff]
    %v90 = vld [vmem:[#allocation3 + $0x8] sm:$0xff]
    %v91 = vld [vmem:[#allocation3 + $0x10] sm:$0xff]
    %v92 = vld [vmem:[#allocation3 + $0x18] sm:$0xff]
    %v93 = vunpack.c.l.s8.bf16 %v89
    %v94 = vunpack.c.h.s8.bf16 %v89
    %v95 = vunpack.c.l.s8.bf16 %v90
    %v96 = vunpack.c.h.s8.bf16 %v90
    %v97 = vunpack.c.l.s8.bf16 %v91
    %v98 = vunpack.c.h.s8.bf16 %v91
    %v99 = vunpack.c.l.s8.bf16 %v92
    %v100 = vunpack.c.h.s8.bf16 %v92
    %v101 = vld [vmem:[#allocation2] sm:$0xff]
    %v102 = vld [vmem:[#allocation2 + $0x8] sm:$0xff]
    %v103 = vld [vmem:[#allocation2 + $0x10] sm:$0xff]
    %v104 = vld [vmem:[#allocation2 + $0x18] sm:$0xff]
    %v105 = vld [vmem:[#allocation2 + $0x20] sm:$0xff]
    %v106 = vld [vmem:[#allocation2 + $0x28] sm:$0xff]
    %v107 = vld [vmem:[#allocation2 + $0x30] sm:$0xff]
    %v108 = vld [vmem:[#allocation2 + $0x38] sm:$0xff]
    %v109 = vld [vmem:[#allocation2 + $0x40] sm:$0xff]
    %v110 = vld [vmem:[#allocation2 + $0x48] sm:$0xff]
    %v111 = vld [vmem:[#allocation2 + $0x50] sm:$0xff]
    %v112 = vld [vmem:[#allocation2 + $0x58] sm:$0xff]
    %v113 = vld [vmem:[#allocation2 + $0x60] sm:$0xff]
    %v114 = vld [vmem:[#allocation2 + $0x68] sm:$0xff]
    %v115 = vld [vmem:[#allocation2 + $0x70] sm:$0xff]
    %v116 = vld [vmem:[#allocation2 + $0x78] sm:$0xff]
    %v117 = vld [vmem:[%s1] sm:$0xf]
    %v118 = vld [vmem:[%s1 + $0x4] sm:$0xf]
    %v119 = vld [vmem:[%s1 + $0x8] sm:$0xf]
    %v120 = vld [vmem:[%s1 + $0xc] sm:$0xf]
    %v121 = vld [vmem:[%s1 + $0x10] sm:$0xf]
    %v122 = vld [vmem:[%s1 + $0x14] sm:$0xf]
    %v123 = vld [vmem:[%s1 + $0x18] sm:$0xf]
    %v124 = vld [vmem:[%s1 + $0x1c] sm:$0xf]
    %v125 = vld [vmem:[%s1 + $0x20] sm:$0xf]
    %v126 = vld [vmem:[%s1 + $0x24] sm:$0xf]
    %v127 = vld [vmem:[%s1 + $0x28] sm:$0xf]
    %v128 = vld [vmem:[%s1 + $0x2c] sm:$0xf]
    %v129 = vld [vmem:[%s1 + $0x30] sm:$0xf]
    %v130 = vld [vmem:[%s1 + $0x34] sm:$0xf]
    %v131 = vld [vmem:[%s1 + $0x38] sm:$0xf]
    %v132 = vld [vmem:[%s1 + $0x3c] sm:$0xf]
    %v149 = vunpack.c.l.b16 %v117
    %v150 = vunpack.c.l.b16 %v118
    %v151 = vunpack.c.l.b16 %v119
    %v152 = vunpack.c.l.b16 %v120
    %v153 = vunpack.c.l.b16 %v121
    %v154 = vunpack.c.l.b16 %v122
    %v155 = vunpack.c.l.b16 %v123
    %v156 = vunpack.c.l.b16 %v124
    %v157 = vunpack.c.l.b16 %v125
    %v158 = vunpack.c.l.b16 %v126
    %v159 = vunpack.c.l.b16 %v127
    %v160 = vunpack.c.l.b16 %v128
    %v161 = vunpack.c.l.b16 %v129
    %v162 = vunpack.c.l.b16 %v130
    %v163 = vunpack.c.l.b16 %v131
    %v164 = vunpack.c.l.b16 %v132
    %v165 = vpack.c.b16 %v150, %v149
    %v166 = vpack.c.b16 %v152, %v151
    %v167 = vpack.c.b16 %v154, %v153
    %v168 = vpack.c.b16 %v156, %v155
    %v169 = vpack.c.b16 %v158, %v157
    %v170 = vpack.c.b16 %v160, %v159
    %v171 = vpack.c.b16 %v162, %v161
    %v172 = vpack.c.b16 %v164, %v163
    %181 = vmatprep.subr.bf16.mxu0 0
    %182 = vmatpush1.bf16.msra.mxu0 %v172
    %183 = vmatprep.subr.bf16.mxu0 0
    %184 = vmatpush1.bf16.msra.mxu0 %v171
    %185 = vmatprep.subr.bf16.mxu0 0
    %186 = vmatpush1.bf16.msra.mxu0 %v170
    %187 = vmatprep.subr.bf16.mxu0 0
    %188 = vmatpush1.bf16.msra.mxu0 %v169
    %189 = vmatprep.subr.bf16.mxu0 0
    %190 = vmatpush1.bf16.msra.mxu0 %v168
    %191 = vmatprep.subr.bf16.mxu0 0
    %192 = vmatpush1.bf16.msra.mxu0 %v167
    %193 = vmatprep.subr.bf16.mxu0 0
    %194 = vmatpush1.bf16.msra.mxu0 %v166
    %195 = vmatprep.subr.bf16.mxu0 0
    %196 = vmatpush1.bf16.msra.mxu0 %v165
    %197 = vmatprep.subr.bf16.mxu0 0
    %198 = vmatpush2.bf16.msra.mxu0 0
    %199 = vmatprep.subr.bf16.mxu0 0
    %200 = vmatpush2.bf16.msra.mxu0 0
    %201 = vmatprep.subr.bf16.mxu0 0
    %202 = vmatpush2.bf16.msra.mxu0 0
    %203 = vmatprep.subr.bf16.mxu0 0
    %204 = vmatpush2.bf16.msra.mxu0 0
    %205 = vmatprep.subr.bf16.mxu0 0
    %206 = vmatpush2.bf16.msra.mxu0 0
    %207 = vmatprep.subr.bf16.mxu0 0
    %208 = vmatpush2.bf16.msra.mxu0 0
    %209 = vmatprep.subr.bf16.mxu0 0
    %210 = vmatpush2.bf16.msra.mxu0 0
    %211 = vmatprep.subr.bf16.mxu0 0
    %212 = vmatpush2.bf16.msra.mxu0 0
    %213 = vmatprep.mubr.bf16.mxu0 0
    %214 = vmatmul.mubr.bf16.gmra.mxu0 %v93
    %v215 = vpop.f32.mrf.mxu0
    %v216 = vadd.f32 0.0, %v215
    %v217 = vpop.f32.mrf.mxu0
    %v218 = vpop.f32.mrf.mxu0
    %v219 = vadd.f32 0.0, %v218
    %v220 = vpop.f32.mrf.mxu0
    %221 = vmatprep.mubr.bf16.mxu0 0
    %222 = vmatmul.mubr.bf16.gmra.mxu0 %v94
    %v223 = vpop.f32.mrf.mxu0
    %v224 = vadd.f32 0.0, %v223
    %v225 = vpop.f32.mrf.mxu0
    %v226 = vpop.f32.mrf.mxu0
    %v227 = vadd.f32 0.0, %v226
    %v228 = vpop.f32.mrf.mxu0
    %229 = vmatprep.mubr.bf16.mxu0 0
    %230 = vmatmul.mubr.bf16.gmra.mxu0 %v95
    %v231 = vpop.f32.mrf.mxu0
    %v232 = vadd.f32 0.0, %v231
    %v233 = vpop.f32.mrf.mxu0
    %v234 = vpop.f32.mrf.mxu0
    %v235 = vadd.f32 0.0, %v234
    %v236 = vpop.f32.mrf.mxu0
    %237 = vmatprep.mubr.bf16.mxu0 0
    %238 = vmatmul.mubr.bf16.gmra.mxu0 %v96
    %v239 = vpop.f32.mrf.mxu0
    %v240 = vadd.f32 0.0, %v239
    %v241 = vpop.f32.mrf.mxu0
    %v242 = vpop.f32.mrf.mxu0
    %v243 = vadd.f32 0.0, %v242
    %v244 = vpop.f32.mrf.mxu0
    %245 = vmatprep.mubr.bf16.mxu0 0
    %246 = vmatmul.mubr.bf16.gmra.mxu0 %v97
    %v247 = vpop.f32.mrf.mxu0
    %v248 = vadd.f32 0.0, %v247
    %v249 = vpop.f32.mrf.mxu0
    %v250 = vpop.f32.mrf.mxu0
    %v251 = vadd.f32 0.0, %v250
    %v252 = vpop.f32.mrf.mxu0
    %253 = vmatprep.mubr.bf16.mxu0 0
    %254 = vmatmul.mubr.bf16.gmra.mxu0 %v98
    %v255 = vpop.f32.mrf.mxu0
    %v256 = vadd.f32 0.0, %v255
    %v257 = vpop.f32.mrf.mxu0
    %v258 = vpop.f32.mrf.mxu0
    %v259 = vadd.f32 0.0, %v258
    %v260 = vpop.f32.mrf.mxu0
    %261 = vmatprep.mubr.bf16.mxu0 0
    %262 = vmatmul.mubr.bf16.gmra.mxu0 %v99
    %v263 = vpop.f32.mrf.mxu0
    %v264 = vadd.f32 0.0, %v263
    %v265 = vpop.f32.mrf.mxu0
    %v266 = vpop.f32.mrf.mxu0
    %v267 = vadd.f32 0.0, %v266
    %v268 = vpop.f32.mrf.mxu0
    %269 = vmatprep.mubr.bf16.mxu0 0
    %270 = vmatmul.mubr.bf16.gmra.mxu0 %v100
    %v271 = vpop.f32.mrf.mxu0
    %v272 = vadd.f32 0.0, %v271
    %v273 = vpop.f32.mrf.mxu0
    %v274 = vpop.f32.mrf.mxu0
    %v275 = vadd.f32 0.0, %v274
    %v276 = vpop.f32.mrf.mxu0
    %277 = vdwg.mxu0
    %v278 = vadd.f32 %v101, %v216
    %v279 = vadd.f32 %v102, %v219
    %v280 = vadd.f32 %v103, %v224
    %v281 = vadd.f32 %v104, %v227
    %v282 = vadd.f32 %v105, %v232
    %v283 = vadd.f32 %v106, %v235
    %v284 = vadd.f32 %v107, %v240
    %v285 = vadd.f32 %v108, %v243
    %v286 = vadd.f32 %v109, %v248
    %v287 = vadd.f32 %v110, %v251
    %v288 = vadd.f32 %v111, %v256
    %v289 = vadd.f32 %v112, %v259
    %v290 = vadd.f32 %v113, %v264
    %v291 = vadd.f32 %v114, %v267
    %v292 = vadd.f32 %v115, %v272
    %v293 = vadd.f32 %v116, %v275
    %294 = vst [vmem:[#allocation2] sm:$0xff] %v278
    %295 = vst [vmem:[#allocation2 + $0x8] sm:$0xff] %v279
    %296 = vst [vmem:[#allocation2 + $0x10] sm:$0xff] %v280
    %297 = vst [vmem:[#allocation2 + $0x18] sm:$0xff] %v281
    %298 = vst [vmem:[#allocation2 + $0x20] sm:$0xff] %v282
    %299 = vst [vmem:[#allocation2 + $0x28] sm:$0xff] %v283
    %300 = vst [vmem:[#allocation2 + $0x30] sm:$0xff] %v284
    %301 = vst [vmem:[#allocation2 + $0x38] sm:$0xff] %v285
    %302 = vst [vmem:[#allocation2 + $0x40] sm:$0xff] %v286
    %303 = vst [vmem:[#allocation2 + $0x48] sm:$0xff] %v287
    %304 = vst [vmem:[#allocation2 + $0x50] sm:$0xff] %v288
    %305 = vst [vmem:[#allocation2 + $0x58] sm:$0xff] %v289
    %306 = vst [vmem:[#allocation2 + $0x60] sm:$0xff] %v290
    %307 = vst [vmem:[#allocation2 + $0x68] sm:$0xff] %v291
    %308 = vst [vmem:[#allocation2 + $0x70] sm:$0xff] %v292
    %309 = vst [vmem:[#allocation2 + $0x78] sm:$0xff] %v293
    // Predicated region
    $region46: #{tpu_custom_call.1} parent=1 // pred_check
      %p310 = pneg %p69
    $region47: #{tpu_custom_call.1} parent=1 // pred_check_branch
      %312 = sbr.rel (%p310) target = $region49
    $region48: #{tpu_custom_call.1} parent=1 // pred_region
      %v313 = vld [vmem:[#allocation2] sm:$0xff]
      %v314 = vld [vmem:[#allocation2 + $0x8] sm:$0xff]
      %v315 = vld [vmem:[#allocation2 + $0x10] sm:$0xff]
      %v316 = vld [vmem:[#allocation2 + $0x18] sm:$0xff]
      %v317 = vld [vmem:[#allocation2 + $0x20] sm:$0xff]
      %v318 = vld [vmem:[#allocation2 + $0x28] sm:$0xff]
      %v319 = vld [vmem:[#allocation2 + $0x30] sm:$0xff]
      %v320 = vld [vmem:[#allocation2 + $0x38] sm:$0xff]
      %v321 = vld [vmem:[#allocation2 + $0x40] sm:$0xff]
      %v322 = vld [vmem:[#allocation2 + $0x48] sm:$0xff]
      %v323 = vld [vmem:[#allocation2 + $0x50] sm:$0xff]
      %v324 = vld [vmem:[#allocation2 + $0x58] sm:$0xff]
      %v325 = vld [vmem:[#allocation2 + $0x60] sm:$0xff]
      %v326 = vld [vmem:[#allocation2 + $0x68] sm:$0xff]
      %v327 = vld [vmem:[#allocation2 + $0x70] sm:$0xff]
      %v328 = vld [vmem:[#allocation2 + $0x78] sm:$0xff]
      %v329 = vld [vmem:[%s3] sm:$0xff]
      %v330 = vld [vmem:[%s3 + $0x8] sm:$0xff]
      %v331 = vld [vmem:[%s3 + $0x10] sm:$0xff]
      %v332 = vld [vmem:[%s3 + $0x18] sm:$0xff]
      %v333 = vld [vmem:[%s3 + $0x20] sm:$0xff]
      %v334 = vld [vmem:[%s3 + $0x28] sm:$0xff]
      %v335 = vld [vmem:[%s3 + $0x30] sm:$0xff]
      %v336 = vld [vmem:[%s3 + $0x38] sm:$0xff]
      %v337 = vld [vmem:[%s3 + $0x40] sm:$0xff]
      %v338 = vld [vmem:[%s3 + $0x48] sm:$0xff]
      %v339 = vld [vmem:[%s3 + $0x50] sm:$0xff]
      %v340 = vld [vmem:[%s3 + $0x58] sm:$0xff]
      %v341 = vld [vmem:[%s3 + $0x60] sm:$0xff]
      %v342 = vld [vmem:[%s3 + $0x68] sm:$0xff]
      %v343 = vld [vmem:[%s3 + $0x70] sm:$0xff]
      %v344 = vld [vmem:[%s3 + $0x78] sm:$0xff]
      %346 = vset.pattern.permute.xlu0 0
      %347 = vperm.xlu0 %346, %v329
      %v348 = vpop.permute.xlu0 %347
      %351 = vset.pattern.permute.xlu0 0
      %352 = vperm.xlu0 %351, %v330
      %v353 = vpop.permute.xlu0 %352
      %356 = vset.pattern.permute.xlu0 0
      %357 = vperm.xlu0 %356, %v331
      %v358 = vpop.permute.xlu0 %357
      %361 = vset.pattern.permute.xlu0 0
      %362 = vperm.xlu0 %361, %v332
      %v363 = vpop.permute.xlu0 %362
      %366 = vset.pattern.permute.xlu0 0
      %367 = vperm.xlu0 %366, %v333
      %v368 = vpop.permute.xlu0 %367
      %371 = vset.pattern.permute.xlu0 0
      %372 = vperm.xlu0 %371, %v334
      %v373 = vpop.permute.xlu0 %372
      %376 = vset.pattern.permute.xlu0 0
      %377 = vperm.xlu0 %376, %v335
      %v378 = vpop.permute.xlu0 %377
      %381 = vset.pattern.permute.xlu0 0
      %382 = vperm.xlu0 %381, %v336
      %v383 = vpop.permute.xlu0 %382
      %386 = vset.pattern.permute.xlu0 0
      %387 = vperm.xlu0 %386, %v337
      %v388 = vpop.permute.xlu0 %387
      %391 = vset.pattern.permute.xlu0 0
      %392 = vperm.xlu0 %391, %v338
      %v393 = vpop.permute.xlu0 %392
      %396 = vset.pattern.permute.xlu0 0
      %397 = vperm.xlu0 %396, %v339
      %v398 = vpop.permute.xlu0 %397
      %401 = vset.pattern.permute.xlu0 0
      %402 = vperm.xlu0 %401, %v340
      %v403 = vpop.permute.xlu0 %402
      %406 = vset.pattern.permute.xlu0 0
      %407 = vperm.xlu0 %406, %v341
      %v408 = vpop.permute.xlu0 %407
      %411 = vset.pattern.permute.xlu0 0
      %412 = vperm.xlu0 %411, %v342
      %v413 = vpop.permute.xlu0 %412
      %416 = vset.pattern.permute.xlu0 0
      %417 = vperm.xlu0 %416, %v343
      %v418 = vpop.permute.xlu0 %417
      %421 = vset.pattern.permute.xlu0 0
      %422 = vperm.xlu0 %421, %v344
      %v423 = vpop.permute.xlu0 %422
      %v425 = vmul.f32 %v313, %v348
      %v426 = vmul.f32 %v314, %v353
      %v427 = vmul.f32 %v315, %v358
      %v428 = vmul.f32 %v316, %v363
      %v429 = vmul.f32 %v317, %v368
      %v430 = vmul.f32 %v318, %v373
      %v431 = vmul.f32 %v319, %v378
      %v432 = vmul.f32 %v320, %v383
      %v433 = vmul.f32 %v321, %v388
      %v434 = vmul.f32 %v322, %v393
      %v435 = vmul.f32 %v323, %v398
      %v436 = vmul.f32 %v324, %v403
      %v437 = vmul.f32 %v325, %v408
      %v438 = vmul.f32 %v326, %v413
      %v439 = vmul.f32 %v327, %v418
      %v440 = vmul.f32 %v328, %v423
      %v441 = vpack.c.bf16 %v426, %v425
      %v442 = vpack.c.bf16 %v428, %v427
      %v443 = vpack.c.bf16 %v430, %v429
      %v444 = vpack.c.bf16 %v432, %v431
      %v445 = vpack.c.bf16 %v434, %v433
      %v446 = vpack.c.bf16 %v436, %v435
      %v447 = vpack.c.bf16 %v438, %v437
      %v448 = vpack.c.bf16 %v440, %v439
      %v449 = vld [vmem:[%s2] sm:$0xf]
      %v450 = vld [vmem:[%s2 + $0x4] sm:$0xf]
      %v451 = vld [vmem:[%s2 + $0x8] sm:$0xf]
      %v452 = vld [vmem:[%s2 + $0xc] sm:$0xf]
      %v453 = vld [vmem:[%s2 + $0x10] sm:$0xf]
      %v454 = vld [vmem:[%s2 + $0x14] sm:$0xf]
      %v455 = vld [vmem:[%s2 + $0x18] sm:$0xf]
      %v456 = vld [vmem:[%s2 + $0x1c] sm:$0xf]
      %v457 = vld [vmem:[%s2 + $0x20] sm:$0xf]
      %v458 = vld [vmem:[%s2 + $0x24] sm:$0xf]
      %v459 = vld [vmem:[%s2 + $0x28] sm:$0xf]
      %v460 = vld [vmem:[%s2 + $0x2c] sm:$0xf]
      %v461 = vld [vmem:[%s2 + $0x30] sm:$0xf]
      %v462 = vld [vmem:[%s2 + $0x34] sm:$0xf]
      %v463 = vld [vmem:[%s2 + $0x38] sm:$0xf]
      %v464 = vld [vmem:[%s2 + $0x3c] sm:$0xf]
      %v465 = vld [vmem:[#allocation6] sm:$0xf]
      %v466 = vld [vmem:[#allocation6 + $0x4] sm:$0xf]
      %v467 = vld [vmem:[#allocation6 + $0x8] sm:$0xf]
      %v468 = vld [vmem:[#allocation6 + $0xc] sm:$0xf]
      %v469 = vld [vmem:[#allocation6 + $0x10] sm:$0xf]
      %v470 = vld [vmem:[#allocation6 + $0x14] sm:$0xf]
      %v471 = vld [vmem:[#allocation6 + $0x18] sm:$0xf]
      %v472 = vld [vmem:[#allocation6 + $0x1c] sm:$0xf]
      %v473 = vld [vmem:[#allocation6 + $0x20] sm:$0xf]
      %v474 = vld [vmem:[#allocation6 + $0x24] sm:$0xf]
      %v475 = vld [vmem:[#allocation6 + $0x28] sm:$0xf]
      %v476 = vld [vmem:[#allocation6 + $0x2c] sm:$0xf]
      %v477 = vld [vmem:[#allocation6 + $0x30] sm:$0xf]
      %v478 = vld [vmem:[#allocation6 + $0x34] sm:$0xf]
      %v479 = vld [vmem:[#allocation6 + $0x38] sm:$0xf]
      %v480 = vld [vmem:[#allocation6 + $0x3c] sm:$0xf]
      %v481 = vld [vmem:[#allocation8] sm:$0xf]
      %v482 = vld [vmem:[#allocation8 + $0x4] sm:$0xf]
      %v483 = vld [vmem:[#allocation8 + $0x8] sm:$0xf]
      %v484 = vld [vmem:[#allocation8 + $0xc] sm:$0xf]
      %v485 = vld [vmem:[#allocation8 + $0x10] sm:$0xf]
      %v486 = vld [vmem:[#allocation8 + $0x14] sm:$0xf]
      %v487 = vld [vmem:[#allocation8 + $0x18] sm:$0xf]
      %v488 = vld [vmem:[#allocation8 + $0x1c] sm:$0xf]
      %v489 = vld [vmem:[#allocation8 + $0x20] sm:$0xf]
      %v490 = vld [vmem:[#allocation8 + $0x24] sm:$0xf]
      %v491 = vld [vmem:[#allocation8 + $0x28] sm:$0xf]
      %v492 = vld [vmem:[#allocation8 + $0x2c] sm:$0xf]
      %v493 = vld [vmem:[#allocation8 + $0x30] sm:$0xf]
      %v494 = vld [vmem:[#allocation8 + $0x34] sm:$0xf]
      %v495 = vld [vmem:[#allocation8 + $0x38] sm:$0xf]
      %v496 = vld [vmem:[#allocation8 + $0x3c] sm:$0xf]
      %v513 = vunpack.c.l.b16 %v481
      %v514 = vunpack.c.l.b16 %v482
      %v515 = vunpack.c.l.b16 %v483
      %v516 = vunpack.c.l.b16 %v484
      %v517 = vunpack.c.l.b16 %v485
      %v518 = vunpack.c.l.b16 %v486
      %v519 = vunpack.c.l.b16 %v487
      %v520 = vunpack.c.l.b16 %v488
      %v521 = vunpack.c.l.b16 %v489
      %v522 = vunpack.c.l.b16 %v490
      %v523 = vunpack.c.l.b16 %v491
      %v524 = vunpack.c.l.b16 %v492
      %v525 = vunpack.c.l.b16 %v493
      %v526 = vunpack.c.l.b16 %v494
      %v527 = vunpack.c.l.b16 %v495
      %v528 = vunpack.c.l.b16 %v496
      %v529 = vpack.c.b16 %v514, %v513
      %v530 = vpack.c.b16 %v516, %v515
      %v531 = vpack.c.b16 %v518, %v517
      %v532 = vpack.c.b16 %v520, %v519
      %v533 = vpack.c.b16 %v522, %v521
      %v534 = vpack.c.b16 %v524, %v523
      %v535 = vpack.c.b16 %v526, %v525
      %v536 = vpack.c.b16 %v528, %v527
      %545 = vmatprep.subr.bf16.mxu0 0
      %546 = vmatpush1.bf16.msra.mxu0 %v536
      %547 = vmatprep.subr.bf16.mxu0 0
      %548 = vmatpush1.bf16.msra.mxu0 %v535
      %549 = vmatprep.subr.bf16.mxu0 0
      %550 = vmatpush1.bf16.msra.mxu0 %v534
      %551 = vmatprep.subr.bf16.mxu0 0
      %552 = vmatpush1.bf16.msra.mxu0 %v533
      %553 = vmatprep.subr.bf16.mxu0 0
      %554 = vmatpush1.bf16.msra.mxu0 %v532
      %555 = vmatprep.subr.bf16.mxu0 0
      %556 = vmatpush1.bf16.msra.mxu0 %v531
      %557 = vmatprep.subr.bf16.mxu0 0
      %558 = vmatpush1.bf16.msra.mxu0 %v530
      %559 = vmatprep.subr.bf16.mxu0 0
      %560 = vmatpush1.bf16.msra.mxu0 %v529
      %561 = vmatprep.subr.bf16.mxu0 0
      %562 = vmatpush2.bf16.msra.mxu0 0
      %563 = vmatprep.subr.bf16.mxu0 0
      %564 = vmatpush2.bf16.msra.mxu0 0
      %565 = vmatprep.subr.bf16.mxu0 0
      %566 = vmatpush2.bf16.msra.mxu0 0
      %567 = vmatprep.subr.bf16.mxu0 0
      %568 = vmatpush2.bf16.msra.mxu0 0
      %569 = vmatprep.subr.bf16.mxu0 0
      %570 = vmatpush2.bf16.msra.mxu0 0
      %571 = vmatprep.subr.bf16.mxu0 0
      %572 = vmatpush2.bf16.msra.mxu0 0
      %573 = vmatprep.subr.bf16.mxu0 0
      %574 = vmatpush2.bf16.msra.mxu0 0
      %575 = vmatprep.subr.bf16.mxu0 0
      %576 = vmatpush2.bf16.msra.mxu0 0
      %577 = vmatprep.mubr.bf16.mxu0 0
      %578 = vmatmul.mubr.bf16.gmra.mxu0 %v441
      %v579 = vpop.f32.mrf.mxu0
      %v580 = vadd.f32 0.0, %v579
      %v581 = vpop.f32.mrf.mxu0
      %v582 = vpop.f32.mrf.mxu0
      %v583 = vadd.f32 0.0, %v582
      %v584 = vpop.f32.mrf.mxu0
      %585 = vmatprep.mubr.bf16.mxu0 0
      %586 = vmatmul.mubr.bf16.gmra.mxu0 %v442
      %v587 = vpop.f32.mrf.mxu0
      %v588 = vadd.f32 0.0, %v587
      %v589 = vpop.f32.mrf.mxu0
      %v590 = vpop.f32.mrf.mxu0
      %v591 = vadd.f32 0.0, %v590
      %v592 = vpop.f32.mrf.mxu0
      %593 = vmatprep.mubr.bf16.mxu0 0
      %594 = vmatmul.mubr.bf16.gmra.mxu0 %v443
      %v595 = vpop.f32.mrf.mxu0
      %v596 = vadd.f32 0.0, %v595
      %v597 = vpop.f32.mrf.mxu0
      %v598 = vpop.f32.mrf.mxu0
      %v599 = vadd.f32 0.0, %v598
      %v600 = vpop.f32.mrf.mxu0
      %601 = vmatprep.mubr.bf16.mxu0 0
      %602 = vmatmul.mubr.bf16.gmra.mxu0 %v444
      %v603 = vpop.f32.mrf.mxu0
      %v604 = vadd.f32 0.0, %v603
      %v605 = vpop.f32.mrf.mxu0
      %v606 = vpop.f32.mrf.mxu0
      %v607 = vadd.f32 0.0, %v606
      %v608 = vpop.f32.mrf.mxu0
      %609 = vmatprep.mubr.bf16.mxu0 0
      %610 = vmatmul.mubr.bf16.gmra.mxu0 %v445
      %v611 = vpop.f32.mrf.mxu0
      %v612 = vadd.f32 0.0, %v611
      %v613 = vpop.f32.mrf.mxu0
      %v614 = vpop.f32.mrf.mxu0
      %v615 = vadd.f32 0.0, %v614
      %v616 = vpop.f32.mrf.mxu0
      %617 = vmatprep.mubr.bf16.mxu0 0
      %618 = vmatmul.mubr.bf16.gmra.mxu0 %v446
      %v619 = vpop.f32.mrf.mxu0
      %v620 = vadd.f32 0.0, %v619
      %v621 = vpop.f32.mrf.mxu0
      %v622 = vpop.f32.mrf.mxu0
      %v623 = vadd.f32 0.0, %v622
      %v624 = vpop.f32.mrf.mxu0
      %625 = vmatprep.mubr.bf16.mxu0 0
      %626 = vmatmul.mubr.bf16.gmra.mxu0 %v447
      %v627 = vpop.f32.mrf.mxu0
      %v628 = vadd.f32 0.0, %v627
      %v629 = vpop.f32.mrf.mxu0
      %v630 = vpop.f32.mrf.mxu0
      %v631 = vadd.f32 0.0, %v630
      %v632 = vpop.f32.mrf.mxu0
      %633 = vmatprep.mubr.bf16.mxu0 0
      %634 = vmatmul.mubr.bf16.gmra.mxu0 %v448
      %v635 = vpop.f32.mrf.mxu0
      %v636 = vadd.f32 0.0, %v635
      %v637 = vpop.f32.mrf.mxu0
      %v638 = vpop.f32.mrf.mxu0
      %v639 = vadd.f32 0.0, %v638
      %v640 = vpop.f32.mrf.mxu0
      %641 = vdwg.mxu0
      %v658 = vunpack.c.l.b16 %v449
      %v659 = vunpack.c.l.b16 %v450
      %v660 = vunpack.c.l.b16 %v451
      %v661 = vunpack.c.l.b16 %v452
      %v662 = vunpack.c.l.b16 %v453
      %v663 = vunpack.c.l.b16 %v454
      %v664 = vunpack.c.l.b16 %v455
      %v665 = vunpack.c.l.b16 %v456
      %v666 = vunpack.c.l.b16 %v457
      %v667 = vunpack.c.l.b16 %v458
      %v668 = vunpack.c.l.b16 %v459
      %v669 = vunpack.c.l.b16 %v460
      %v670 = vunpack.c.l.b16 %v461
      %v671 = vunpack.c.l.b16 %v462
      %v672 = vunpack.c.l.b16 %v463
      %v673 = vunpack.c.l.b16 %v464
      %v674 = vpack.c.b16 %v659, %v658
      %v675 = vpack.c.b16 %v661, %v660
      %v676 = vpack.c.b16 %v663, %v662
      %v677 = vpack.c.b16 %v665, %v664
      %v678 = vpack.c.b16 %v667, %v666
      %v679 = vpack.c.b16 %v669, %v668
      %v680 = vpack.c.b16 %v671, %v670
      %v681 = vpack.c.b16 %v673, %v672
      %v706 = vunpack.c.l.b16 %v465
      %v707 = vunpack.c.l.b16 %v466
      %v708 = vunpack.c.l.b16 %v467
      %v709 = vunpack.c.l.b16 %v468
      %v710 = vunpack.c.l.b16 %v469
      %v711 = vunpack.c.l.b16 %v470
      %v712 = vunpack.c.l.b16 %v471
      %v713 = vunpack.c.l.b16 %v472
      %v714 = vunpack.c.l.b16 %v473
      %v715 = vunpack.c.l.b16 %v474
      %v716 = vunpack.c.l.b16 %v475
      %v717 = vunpack.c.l.b16 %v476
      %v718 = vunpack.c.l.b16 %v477
      %v719 = vunpack.c.l.b16 %v478
      %v720 = vunpack.c.l.b16 %v479
      %v721 = vunpack.c.l.b16 %v480
      %v722 = vpack.c.b16 %v707, %v706
      %v723 = vpack.c.b16 %v709, %v708
      %v724 = vpack.c.b16 %v711, %v710
      %v725 = vpack.c.b16 %v713, %v712
      %v726 = vpack.c.b16 %v715, %v714
      %v727 = vpack.c.b16 %v717, %v716
      %v728 = vpack.c.b16 %v719, %v718
      %v729 = vpack.c.b16 %v721, %v720
      %738 = vmatprep.subr.bf16.mxu0 0
      %739 = vmatpush1.bf16.msra.mxu0 %v729
      %740 = vmatprep.subr.bf16.mxu0 0
      %741 = vmatpush1.bf16.msra.mxu0 %v728
      %742 = vmatprep.subr.bf16.mxu0 0
      %743 = vmatpush1.bf16.msra.mxu0 %v727
      %744 = vmatprep.subr.bf16.mxu0 0
      %745 = vmatpush1.bf16.msra.mxu0 %v726
      %746 = vmatprep.subr.bf16.mxu0 0
      %747 = vmatpush1.bf16.msra.mxu0 %v725
      %748 = vmatprep.subr.bf16.mxu0 0
      %749 = vmatpush1.bf16.msra.mxu0 %v724
      %750 = vmatprep.subr.bf16.mxu0 0
      %751 = vmatpush1.bf16.msra.mxu0 %v723
      %752 = vmatprep.subr.bf16.mxu0 0
      %753 = vmatpush1.bf16.msra.mxu0 %v722
      %754 = vmatprep.subr.bf16.mxu0 0
      %755 = vmatpush2.bf16.msra.mxu0 0
      %756 = vmatprep.subr.bf16.mxu0 0
      %757 = vmatpush2.bf16.msra.mxu0 0
      %758 = vmatprep.subr.bf16.mxu0 0
      %759 = vmatpush2.bf16.msra.mxu0 0
      %760 = vmatprep.subr.bf16.mxu0 0
      %761 = vmatpush2.bf16.msra.mxu0 0
      %762 = vmatprep.subr.bf16.mxu0 0
      %763 = vmatpush2.bf16.msra.mxu0 0
      %764 = vmatprep.subr.bf16.mxu0 0
      %765 = vmatpush2.bf16.msra.mxu0 0
      %766 = vmatprep.subr.bf16.mxu0 0
      %767 = vmatpush2.bf16.msra.mxu0 0
      %768 = vmatprep.subr.bf16.mxu0 0
      %769 = vmatpush2.bf16.msra.mxu0 0
      %770 = vmatprep.mubr.bf16.mxu0 0
      %771 = vmatmul.mubr.bf16.gmra.mxu0 %v674
      %v772 = vpop.f32.mrf.mxu0
      %v773 = vadd.f32 %v580, %v772
      %v774 = vpop.f32.mrf.mxu0
      %v775 = vpop.f32.mrf.mxu0
      %v776 = vadd.f32 %v583, %v775
      %v777 = vpop.f32.mrf.mxu0
      %778 = vmatprep.mubr.bf16.mxu0 0
      %779 = vmatmul.mubr.bf16.gmra.mxu0 %v675
      %v780 = vpop.f32.mrf.mxu0
      %v781 = vadd.f32 %v588, %v780
      %v782 = vpop.f32.mrf.mxu0
      %v783 = vpop.f32.mrf.mxu0
      %v784 = vadd.f32 %v591, %v783
      %v785 = vpop.f32.mrf.mxu0
      %786 = vmatprep.mubr.bf16.mxu0 0
      %787 = vmatmul.mubr.bf16.gmra.mxu0 %v676
      %v788 = vpop.f32.mrf.mxu0
      %v789 = vadd.f32 %v596, %v788
      %v790 = vpop.f32.mrf.mxu0
      %v791 = vpop.f32.mrf.mxu0
      %v792 = vadd.f32 %v599, %v791
      %v793 = vpop.f32.mrf.mxu0
      %794 = vmatprep.mubr.bf16.mxu0 0
      %795 = vmatmul.mubr.bf16.gmra.mxu0 %v677
      %v796 = vpop.f32.mrf.mxu0
      %v797 = vadd.f32 %v604, %v796
      %v798 = vpop.f32.mrf.mxu0
      %v799 = vpop.f32.mrf.mxu0
      %v800 = vadd.f32 %v607, %v799
      %v801 = vpop.f32.mrf.mxu0
      %802 = vmatprep.mubr.bf16.mxu0 0
      %803 = vmatmul.mubr.bf16.gmra.mxu0 %v678
      %v804 = vpop.f32.mrf.mxu0
      %v805 = vadd.f32 %v612, %v804
      %v806 = vpop.f32.mrf.mxu0
      %v807 = vpop.f32.mrf.mxu0
      %v808 = vadd.f32 %v615, %v807
      %v809 = vpop.f32.mrf.mxu0
      %810 = vmatprep.mubr.bf16.mxu0 0
      %811 = vmatmul.mubr.bf16.gmra.mxu0 %v679
      %v812 = vpop.f32.mrf.mxu0
      %v813 = vadd.f32 %v620, %v812
      %v814 = vpop.f32.mrf.mxu0
      %v815 = vpop.f32.mrf.mxu0
      %v816 = vadd.f32 %v623, %v815
      %v817 = vpop.f32.mrf.mxu0
      %818 = vmatprep.mubr.bf16.mxu0 0
      %819 = vmatmul.mubr.bf16.gmra.mxu0 %v680
      %v820 = vpop.f32.mrf.mxu0
      %v821 = vadd.f32 %v628, %v820
      %v822 = vpop.f32.mrf.mxu0
      %v823 = vpop.f32.mrf.mxu0
      %v824 = vadd.f32 %v631, %v823
      %v825 = vpop.f32.mrf.mxu0
      %826 = vmatprep.mubr.bf16.mxu0 0
      %827 = vmatmul.mubr.bf16.gmra.mxu0 %v681
      %v828 = vpop.f32.mrf.mxu0
      %v829 = vadd.f32 %v636, %v828
      %v830 = vpop.f32.mrf.mxu0
      %v831 = vpop.f32.mrf.mxu0
      %v832 = vadd.f32 %v639, %v831
      %v833 = vpop.f32.mrf.mxu0
      %834 = vdwg.mxu0
      %v835 = vld [vmem:[%s6] sm:$0x1]
      %v837 = vlaneseq
      %v838 = vshrl.u32 %v837, 7
      %v839 = vsub.s32 0, %v838
      %v840 = vrot.slane %v835, %v839
      %v842 = vadd.f32 %v773, %v840
      %v843 = vadd.f32 %v776, %v840
      %v844 = vadd.f32 %v781, %v840
      %v845 = vadd.f32 %v784, %v840
      %v846 = vadd.f32 %v789, %v840
      %v847 = vadd.f32 %v792, %v840
      %v848 = vadd.f32 %v797, %v840
      %v849 = vadd.f32 %v800, %v840
      %v850 = vadd.f32 %v805, %v840
      %v851 = vadd.f32 %v808, %v840
      %v852 = vadd.f32 %v813, %v840
      %v853 = vadd.f32 %v816, %v840
      %v854 = vadd.f32 %v821, %v840
      %v855 = vadd.f32 %v824, %v840
      %v856 = vadd.f32 %v829, %v840
      %v857 = vadd.f32 %v832, %v840
      %858 = vst [vmem:[#allocation9] sm:$0xff] %v842
      %859 = vst [vmem:[#allocation9 + $0x8] sm:$0xff] %v843
      %860 = vst [vmem:[#allocation9 + $0x10] sm:$0xff] %v844
      %861 = vst [vmem:[#allocation9 + $0x18] sm:$0xff] %v845
      %862 = vst [vmem:[#allocation9 + $0x20] sm:$0xff] %v846
      %863 = vst [vmem:[#allocation9 + $0x28] sm:$0xff] %v847
      %864 = vst [vmem:[#allocation9 + $0x30] sm:$0xff] %v848
      %865 = vst [vmem:[#allocation9 + $0x38] sm:$0xff] %v849
      %866 = vst [vmem:[#allocation9 + $0x40] sm:$0xff] %v850
      %867 = vst [vmem:[#allocation9 + $0x48] sm:$0xff] %v851
      %868 = vst [vmem:[#allocation9 + $0x50] sm:$0xff] %v852
      %869 = vst [vmem:[#allocation9 + $0x58] sm:$0xff] %v853
      %870 = vst [vmem:[#allocation9 + $0x60] sm:$0xff] %v854
      %871 = vst [vmem:[#allocation9 + $0x68] sm:$0xff] %v855
      %872 = vst [vmem:[#allocation9 + $0x70] sm:$0xff] %v856
      %873 = vst [vmem:[#allocation9 + $0x78] sm:$0xff] %v857
    $region49: #{tpu_custom_call.1} parent=1 // pred_fallthru
      _
    // Predicated region
    $region50: #{tpu_custom_call.1} parent=1 // pred_check
      _
    $region51: #{tpu_custom_call.1} parent=1 // pred_check_branch
      %875 = sbr.rel (0) target = $region53
    $region52: #{tpu_custom_call.1} parent=1 // pred_region
      %s877 = ssub.s32 2048, 2048
      %878 = vsyncadd [#allocation5], %s877
      %s879 = sshll.u32 [#allocation9], 4
      %s880 = int_to_ptr.vmem [resolvable:$true] %s879
      %885 = dma.vmem_to_hbm [thread:$0]  %s880, 2048, %s7, [#allocation5], 128, 128, 8
    $region53: #{tpu_custom_call.1} parent=1 // pred_fallthru
      _
    // Predicated region
    $region54: #{tpu_custom_call.1} parent=1 // pred_check
      _
    $region55: #{tpu_custom_call.1} parent=1 // pred_check_branch
      %887 = sbr.rel (0) target = $region57
    $region56: #{tpu_custom_call.1} parent=1 // pred_region
      %888 = dma.done [#allocation5], 2048
    $region57: #{tpu_custom_call.1} parent=1 // pred_fallthru
      _
    %889 = vsyncpa [#allocation4], 1
    %890 = vsyncpa [#allocation7], 1
    %891 = vsyncpa [#allocation5], 1

</llo_original>
